<compile_context>
chip_gen: v5e
topology: v5e:2x2
jax: 0.10.0
libtpu: 0.0.40
codegen_flags: <defaults>
</compile_context>

<pallas_src>
import math

import jax
import jax.numpy as jnp
from jax.experimental import pallas as pl
from jax.experimental.pallas import tpu as pltpu

EPS = 1e-3  # BatchNorm2d eps=0.001


def _round_up(x, m):
    return (x + m - 1) // m * m


def _conv_stats_kernel(xa_ref, xb_ref, w_ref, y_ref, stats_ref):
    """One (image, row-block) tile: 4-phase transposed-conv GEMM + partial BN stats.

    xa_ref:   (1, th, W+1, Cin) bf16  rows a   of the zero-padded input
    xb_ref:   (1, th, W+1, Cin) bf16  rows a+1 of the zero-padded input
    w_ref:    (4, Cin, 4*Cout_pad) bf16  per-slot phase-blocked weights (resident)
    y_ref:    (th*W, 4*Cout_pad) bf16  conv output tile (pre-BN)
    stats_ref:(8, 4*Cout_pad)    f32   row0 = sum, row1 = sum of squares
                                       (rows 2..7 intentionally left unwritten)
    """
    _, th, wp1, cin = xa_ref.shape
    wd = wp1 - 1
    a = xa_ref[0]                                   # (th, W+1, Cin)
    b = xb_ref[0]

    def patch(t, col0):                             # x(a+dr, b+dc) as (th*W, Cin)
        return t[:, col0:col0 + wd, :].reshape(th * wd, cin)

    # f32 accumulation on the MXU; compute is free (mem-bound), so four K=Cin dots
    # summed in registers are equivalent to one K=4*Cin dot without any concat.
    y = jnp.dot(patch(a, 0), w_ref[0], preferred_element_type=jnp.float32)
    y = y + jnp.dot(patch(a, 1), w_ref[1], preferred_element_type=jnp.float32)
    y = y + jnp.dot(patch(b, 0), w_ref[2], preferred_element_type=jnp.float32)
    y = y + jnp.dot(patch(b, 1), w_ref[3], preferred_element_type=jnp.float32)

    # BN statistics from the f32 accumulator (before the bf16 store).
    # NOTE: variance is later formed as E[y^2]-E[y]^2 in f32; fine for activation-scale
    # data, consider centered accumulation if |mean| >> std at extreme sizes.
    stats_ref[0:1, :] = jnp.sum(y, axis=0, keepdims=True)
    stats_ref[1:2, :] = jnp.sum(y * y, axis=0, keepdims=True)

    y_ref[...] = y.astype(y_ref.dtype)              # bf16 intermediate (halves HBM traffic)


def upsampler_block(x_nchw, weight, gamma, beta, *, block_h=None):
    """Forward pass of UpsamplerBlock (ConvTranspose2d s=2 + train-mode BN + ReLU).

    x_nchw: (N, Cin, H, W) f32
    weight: (Cin, Cout, 3, 3) f32   (PyTorch ConvTranspose2d layout)
    gamma, beta: (Cout,) f32        (BatchNorm affine)
    returns: (N, Cout, 2H, 2W) f32

    block_h: input rows per grid step (auto: targets ~2048 GEMM rows per step).
    """
    N, Cin, H, W = x_nchw.shape
    Cout = weight.shape[1]
    Ho, Wo = 2 * H, 2 * W

    Cout_pad = _round_up(Cout, 32)      # 4*Cout_pad multiple of 128 -> lane-dense stores
    C4 = 4 * Cout_pad

    # ---- tile geometry ------------------------------------------------------------
    if block_h is None:
        block_h = max(1, 2048 // max(W, 1))          # ~2048 rows per step (review)
    block_h = max(1, min(int(block_h), H))
    step = 8 // math.gcd(W, 8)                        # keep block_h*W a multiple of 8
    block_h = _round_up(block_h, step)
    Hp = _round_up(H, block_h)
    grid_h = Hp // block_h
    BM = block_h * W
    n_tiles = N * grid_h

    # ---- glue: two 1-row-shifted, zero-padded bf16 NHWC views ----------------------
    # xa[n, a] = x[n, a]   (or 0 past the image);  xb[n, a] = x[n, a+1] (or 0).
    # The +1-column shift is done inside the kernel from the (W+1)-wide block.
    x_nhwc = jnp.transpose(x_nchw, (0, 2, 3, 1)).astype(jnp.bfloat16)     # (N,H,W,Cin)
    xpad = jnp.pad(x_nhwc, ((0, 0), (0, Hp + 1 - H), (0, 1), (0, 0)))     # (N,Hp+1,W+1,Cin)
    xa = xpad[:, :Hp]
    xb = xpad[:, 1:Hp + 1]

    # ---- glue: phase/slot weights (4, Cin, 4*Cout_pad) ------------------------------
    # ConvTranspose2d (s=2, p=1, op=1):  oh = 2*ih - 1 + kh, ow = 2*iw - 1 + kw.
    #   EE (2a  ,2b  ): x(a,b)W11
    #   EO (2a  ,2b+1): x(a,b)W12 + x(a,b+1)W10
    #   OE (2a+1,2b  ): x(a,b)W21 + x(a+1,b)W01
    #   OO (2a+1,2b+1): x(a,b)W22 + x(a,b+1)W20 + x(a+1,b)W02 + x(a+1,b+1)W00
    w = weight.astype(jnp.float32)                   # (Cin, Cout, 3, 3)

    def tap(kh, kw):                                 # (Cin, Cout_pad)
        return jnp.pad(w[:, :, kh, kw], ((0, 0), (0, Cout_pad - Cout)))

    Z = jnp.zeros((Cin, Cout_pad), jnp.float32)
    # column blocks = [EE | EO | OE | OO]; slot k multiplies x(a+dr_k, b+dc_k)
    w_s0 = jnp.concatenate([tap(1, 1), tap(1, 2), tap(2, 1), tap(2, 2)], axis=1)  # x(a  ,b  )
    w_s1 = jnp.concatenate([Z,         tap(1, 0), Z,         tap(2, 0)], axis=1)  # x(a  ,b+1)
    w_s2 = jnp.concatenate([Z,         Z,         tap(0, 1), tap(0, 2)], axis=1)  # x(a+1,b  )
    w_s3 = jnp.concatenate([Z,         Z,         Z,         tap(0, 0)], axis=1)  # x(a+1,b+1)
    w4 = jnp.stack([w_s0, w_s1, w_s2, w_s3], axis=0).astype(jnp.bfloat16)         # (4,Cin,C4)

    # ---- single Pallas pass: tiled GEMM -> bf16 y + per-tile BN statistics ---------
    y_flat, stats = pl.pallas_call(
        _conv_stats_kernel,
        out_shape=(jax.ShapeDtypeStruct((N * Hp * W, C4), jnp.bfloat16),
                   jax.ShapeDtypeStruct((n_tiles * 8, C4), jnp.float32)),
        grid=(N, grid_h),
        in_specs=[
            pl.BlockSpec((1, block_h, W + 1, Cin), lambda n, h: (n, h, 0, 0)),
            pl.BlockSpec((1, block_h, W + 1, Cin), lambda n, h: (n, h, 0, 0)),
            pl.BlockSpec((4, Cin, C4), lambda n, h: (0, 0, 0)),
        ],
        out_specs=(
            pl.BlockSpec((BM, C4), lambda n, h: (n * grid_h + h, 0)),
            pl.BlockSpec((8, C4), lambda n, h: (n * grid_h + h, 0)),
        ),
        compiler_params=pltpu.CompilerParams(
            dimension_semantics=("parallel", "parallel")),
    )(xa, xb, w4)

    # ---- glue: reduce BN statistics across tiles and phases -------------------------
    stats = stats.reshape(n_tiles, 8, C4)
    tot = jnp.sum(stats[:, 0, :], axis=0).reshape(4, Cout_pad)[:, :Cout].sum(axis=0)
    tot_sq = jnp.sum(stats[:, 1, :], axis=0).reshape(4, Cout_pad)[:, :Cout].sum(axis=0)
    inv_count = 1.0 / float(N * Ho * Wo)
    mean = tot * inv_count
    var = jnp.maximum(tot_sq * inv_count - mean * mean, 0.0)   # biased (train-mode) var
    scale = gamma.astype(jnp.float32) * jax.lax.rsqrt(var + EPS)
    shift = beta.astype(jnp.float32) - mean * scale
    scale4 = jnp.tile(jnp.pad(scale, (0, Cout_pad - Cout)), 4)  # (C4,)
    shift4 = jnp.tile(jnp.pad(shift, (0, Cout_pad - Cout)), 4)
    # TODO(synk): running_mean/running_var buffer updates of nn.BatchNorm2d are not
    # emitted (forward output in training mode is unaffected).

    # ---- glue: BN affine + ReLU fused into the un-pad / pixel-shuffle / NCHW pass ---
    y = y_flat.reshape(N, Hp, W, C4)[:, :H].astype(jnp.float32)            # (N,H,W,C4)
    out = jnp.maximum(y * scale4 + shift4, 0.0)
    out = out.reshape(N, H, W, 4, Cout_pad)[..., :Cout]                    # (N,H,W,4,Cout)
    out = out.reshape(N, H, W, 2, 2, Cout)                                 # (n,a,b,dr,dc,c)
    out = jnp.transpose(out, (0, 1, 3, 2, 4, 5)).reshape(N, Ho, Wo, Cout)
    return jnp.transpose(out, (0, 3, 1, 2))                                # NCHW


if __name__ == "__main__":
    key = jax.random.PRNGKey(0)
    k1, k2, k3, k4 = jax.random.split(key, 4)

    N, Cin, H, W = 2, 4, 16, 16
    Cout = 8

    x = jax.random.normal(k1, (N, Cin, H, W), jnp.float32)
    weight = 0.1 * jax.random.normal(k2, (Cin, Cout, 3, 3), jnp.float32)
    gamma = 1.0 + 0.1 * jax.random.normal(k3, (Cout,), jnp.float32)
    beta = 0.1 * jax.random.normal(k4, (Cout,), jnp.float32)

    # block_h=6 exercises the multi-tile grid, the cross-tile BN reduction and the
    # padded-rows path (Hp=18 > H=16).  Jit the whole thing so the BN+ReLU epilogue
    # actually fuses into the pixel-shuffle / NCHW transpose.
    fwd = jax.jit(lambda a, b, c, d: upsampler_block(a, b, c, d, block_h=6))
    out = jax.block_until_ready(fwd(x, weight, gamma, beta))
    assert out.shape == (N, Cout, 2 * H, 2 * W), out.shape

    # Pure-JAX reference of the same forward pass.  The kernel feeds the MXU bf16
    # operands (f32 accumulation) and stores the conv intermediate in bf16, so the
    # reference mirrors that quantization; BN statistics / affine / ReLU are f32 in both.
    xq = x.astype(jnp.bfloat16).astype(jnp.float32)
    wq = weight.astype(jnp.bfloat16).astype(jnp.float32)
    w_rot = jnp.transpose(jnp.flip(wq, axis=(2, 3)), (1, 0, 2, 3))  # OIHW
    y_ref = jax.lax.conv_general_dilated(
        xq, w_rot, window_strides=(1, 1), padding=((1, 2), (1, 2)),
        lhs_dilation=(2, 2), dimension_numbers=("NCHW", "OIHW", "NCHW"),
        precision=jax.lax.Precision.HIGHEST)
    mu = jnp.mean(y_ref, axis=(0, 2, 3), keepdims=True)
    var = jnp.mean((y_ref - mu) ** 2, axis=(0, 2, 3), keepdims=True)
    scale_r = gamma.reshape(1, Cout, 1, 1) * jax.lax.rsqrt(var + EPS)
    shift_r = beta.reshape(1, Cout, 1, 1) - mu * scale_r
    yq = y_ref.astype(jnp.bfloat16).astype(jnp.float32)      # mirror bf16 intermediate
    ref = jnp.maximum(yq * scale_r + shift_r, 0.0)

    err = float(jnp.max(jnp.abs(out - ref)))
    # Tolerance reflects the bf16-stored conv intermediate (1 bf16 ulp ~ 0.4% relative).
    assert jnp.allclose(out, ref, atol=2e-2, rtol=2e-2), f"max abs err = {err}"
    print("KERNEL_OK")
</pallas_src>

<mosaic_0001>
module attributes {stable_mosaic.version = 11 : i64} {
  func.func @_conv_stats_kernel(%arg0: i32, %arg1: i32, %arg2: memref<1x6x17x4xbf16, #tpu.memory_space<vmem>>, %arg3: memref<1x6x17x4xbf16, #tpu.memory_space<vmem>>, %arg4: memref<4x4x128xbf16, #tpu.memory_space<vmem>>, %arg5: memref<96x128xbf16, #tpu.memory_space<vmem>>, %arg6: memref<8x128xf32, #tpu.memory_space<vmem>>) attributes {dimension_semantics = [#tpu.dimension_semantics<parallel>, #tpu.dimension_semantics<parallel>], iteration_bounds = array<i64: 2, 3>, scalar_prefetch = 0 : i64, scratch_operands = 0 : i64, tpu.core_type = #tpu.core_type<tc>, window_params = [{transform_indices = @transform_0, window_bounds = array<i64: 1, 6, 17, 4>}, {transform_indices = @transform_1, window_bounds = array<i64: 1, 6, 17, 4>}, {pipeline_mode = #tpu.pipeline_mode<synchronous>, transform_indices = @transform_2, window_bounds = array<i64: 4, 4, 128>}, {transform_indices = @transform_3, window_bounds = array<i64: 96, 128>}, {transform_indices = @transform_4, window_bounds = array<i64: 8, 128>}]} {
    %c0 = arith.constant 0 : index
    %c0_0 = arith.constant 0 : index
    %c0_1 = arith.constant 0 : index
    %c0_2 = arith.constant 0 : index
    %0 = vector.load %arg2[%c0, %c0_0, %c0_1, %c0_2] : memref<1x6x17x4xbf16, #tpu.memory_space<vmem>>, vector<1x6x17x4xbf16>
    %1 = vector.shape_cast %0 : vector<1x6x17x4xbf16> to vector<6x17x4xbf16>
    %c0_3 = arith.constant 0 : index
    %c0_4 = arith.constant 0 : index
    %c0_5 = arith.constant 0 : index
    %c0_6 = arith.constant 0 : index
    %2 = vector.load %arg3[%c0_3, %c0_4, %c0_5, %c0_6] : memref<1x6x17x4xbf16, #tpu.memory_space<vmem>>, vector<1x6x17x4xbf16>
    %3 = vector.shape_cast %2 : vector<1x6x17x4xbf16> to vector<6x17x4xbf16>
    %4 = vector.extract_strided_slice %1 {offsets = [0, 0, 0], sizes = [6, 16, 4], strides = [1, 1, 1]} : vector<6x17x4xbf16> to vector<6x16x4xbf16>
    %5 = vector.shape_cast %4 : vector<6x16x4xbf16> to vector<96x4xbf16>
    %c0_7 = arith.constant 0 : index
    %c0_8 = arith.constant 0 : index
    %c0_9 = arith.constant 0 : index
    %6 = vector.load %arg4[%c0_7, %c0_8, %c0_9] : memref<4x4x128xbf16, #tpu.memory_space<vmem>>, vector<1x4x128xbf16>
    %7 = vector.shape_cast %6 : vector<1x4x128xbf16> to vector<4x128xbf16>
    %cst = arith.constant dense<0.000000e+00> : vector<96x128xf32>
    %8 = tpu.matmul %5, %7, %cst {dimension_numbers = #tpu.dot_dimension_numbers<[1], [0], [0], [1], [0, 0, 1, 1], [], []>} : vector<96x4xbf16>, vector<4x128xbf16>, vector<96x128xf32> -> vector<96x128xf32>
    %9 = vector.extract_strided_slice %1 {offsets = [0, 1, 0], sizes = [6, 16, 4], strides = [1, 1, 1]} : vector<6x17x4xbf16> to vector<6x16x4xbf16>
    %10 = vector.shape_cast %9 : vector<6x16x4xbf16> to vector<96x4xbf16>
    %c1 = arith.constant 1 : index
    %c0_10 = arith.constant 0 : index
    %c0_11 = arith.constant 0 : index
    %11 = vector.load %arg4[%c1, %c0_10, %c0_11] : memref<4x4x128xbf16, #tpu.memory_space<vmem>>, vector<1x4x128xbf16>
    %12 = vector.shape_cast %11 : vector<1x4x128xbf16> to vector<4x128xbf16>
    %cst_12 = arith.constant dense<0.000000e+00> : vector<96x128xf32>
    %13 = tpu.matmul %10, %12, %cst_12 {dimension_numbers = #tpu.dot_dimension_numbers<[1], [0], [0], [1], [0, 0, 1, 1], [], []>} : vector<96x4xbf16>, vector<4x128xbf16>, vector<96x128xf32> -> vector<96x128xf32>
    %14 = arith.addf %8, %13 : vector<96x128xf32>
    %15 = vector.extract_strided_slice %3 {offsets = [0, 0, 0], sizes = [6, 16, 4], strides = [1, 1, 1]} : vector<6x17x4xbf16> to vector<6x16x4xbf16>
    %16 = vector.shape_cast %15 : vector<6x16x4xbf16> to vector<96x4xbf16>
    %c2 = arith.constant 2 : index
    %c0_13 = arith.constant 0 : index
    %c0_14 = arith.constant 0 : index
    %17 = vector.load %arg4[%c2, %c0_13, %c0_14] : memref<4x4x128xbf16, #tpu.memory_space<vmem>>, vector<1x4x128xbf16>
    %18 = vector.shape_cast %17 : vector<1x4x128xbf16> to vector<4x128xbf16>
    %cst_15 = arith.constant dense<0.000000e+00> : vector<96x128xf32>
    %19 = tpu.matmul %16, %18, %cst_15 {dimension_numbers = #tpu.dot_dimension_numbers<[1], [0], [0], [1], [0, 0, 1, 1], [], []>} : vector<96x4xbf16>, vector<4x128xbf16>, vector<96x128xf32> -> vector<96x128xf32>
    %20 = arith.addf %14, %19 : vector<96x128xf32>
    %21 = vector.extract_strided_slice %3 {offsets = [0, 1, 0], sizes = [6, 16, 4], strides = [1, 1, 1]} : vector<6x17x4xbf16> to vector<6x16x4xbf16>
    %22 = vector.shape_cast %21 : vector<6x16x4xbf16> to vector<96x4xbf16>
    %c3 = arith.constant 3 : index
    %c0_16 = arith.constant 0 : index
    %c0_17 = arith.constant 0 : index
    %23 = vector.load %arg4[%c3, %c0_16, %c0_17] : memref<4x4x128xbf16, #tpu.memory_space<vmem>>, vector<1x4x128xbf16>
    %24 = vector.shape_cast %23 : vector<1x4x128xbf16> to vector<4x128xbf16>
    %cst_18 = arith.constant dense<0.000000e+00> : vector<96x128xf32>
    %25 = tpu.matmul %22, %24, %cst_18 {dimension_numbers = #tpu.dot_dimension_numbers<[1], [0], [0], [1], [0, 0, 1, 1], [], []>} : vector<96x4xbf16>, vector<4x128xbf16>, vector<96x128xf32> -> vector<96x128xf32>
    %26 = arith.addf %20, %25 : vector<96x128xf32>
    %cst_19 = arith.constant dense<0.000000e+00> : vector<128xf32>
    %27 = vector.multi_reduction <add>, %26, %cst_19 [0] : vector<96x128xf32> to vector<128xf32>
    %28 = vector.shape_cast %27 : vector<128xf32> to vector<1x128xf32>
    %c0_20 = arith.constant 0 : index
    %c0_21 = arith.constant 0 : index
    %29 = vector.load %arg6[%c0_20, %c0_21] : memref<8x128xf32, #tpu.memory_space<vmem>>, vector<1x128xf32>
    tpu.vector_store %arg6[%c0_20, %c0_21], %28 {strides = array<i32>} : memref<8x128xf32, #tpu.memory_space<vmem>>, vector<1x128xf32>,
    %30 = arith.mulf %26, %26 : vector<96x128xf32>
    %cst_22 = arith.constant dense<0.000000e+00> : vector<128xf32>
    %31 = vector.multi_reduction <add>, %30, %cst_22 [0] : vector<96x128xf32> to vector<128xf32>
    %32 = vector.shape_cast %31 : vector<128xf32> to vector<1x128xf32>
    %c1_23 = arith.constant 1 : index
    %c0_24 = arith.constant 0 : index
    %33 = vector.load %arg6[%c1_23, %c0_24] : memref<8x128xf32, #tpu.memory_space<vmem>>, vector<1x128xf32>
    tpu.vector_store %arg6[%c1_23, %c0_24], %32 {strides = array<i32>} : memref<8x128xf32, #tpu.memory_space<vmem>>, vector<1x128xf32>,
    %34 = arith.truncf %26 : vector<96x128xf32> to vector<96x128xbf16>
    %c0_25 = arith.constant 0 : index
    %c0_26 = arith.constant 0 : index
    %35 = vector.load %arg5[%c0_25, %c0_26] : memref<96x128xbf16, #tpu.memory_space<vmem>>, vector<96x128xbf16>
    tpu.vector_store %arg5[%c0_25, %c0_26], %34 {strides = array<i32>} : memref<96x128xbf16, #tpu.memory_space<vmem>>, vector<96x128xbf16>,
    return
  }
  func.func @transform_0(%arg0: i32, %arg1: i32) -> (i32, i32, i32, i32) {
    %c0_i32 = arith.constant 0 : i32
    %c0_i32_0 = arith.constant 0 : i32
    %c0_i32_1 = arith.constant 0 : i32
    return %arg0, %arg1, %c0_i32, %c0_i32_0 : i32, i32, i32, i32
  }
  func.func @transform_1(%arg0: i32, %arg1: i32) -> (i32, i32, i32, i32) {
    %c0_i32 = arith.constant 0 : i32
    %c0_i32_0 = arith.constant 0 : i32
    %c0_i32_1 = arith.constant 0 : i32
    return %arg0, %arg1, %c0_i32, %c0_i32_0 : i32, i32, i32, i32
  }
  func.func @transform_2(%arg0: i32, %arg1: i32) -> (i32, i32, i32) {
    %c0_i32 = arith.constant 0 : i32
    %c0_i32_0 = arith.constant 0 : i32
    %c0_i32_1 = arith.constant 0 : i32
    %c0_i32_2 = arith.constant 0 : i32
    return %c0_i32, %c0_i32_0, %c0_i32_1 : i32, i32, i32
  }
  func.func @transform_3(%arg0: i32, %arg1: i32) -> (i32, i32) {
    %c3_i32 = arith.constant 3 : i32
    %0 = arith.muli %arg0, %c3_i32 : i32
    %1 = arith.addi %0, %arg1 : i32
    %c0_i32 = arith.constant 0 : i32
    %c0_i32_0 = arith.constant 0 : i32
    return %1, %c0_i32 : i32, i32
  }
  func.func @transform_4(%arg0: i32, %arg1: i32) -> (i32, i32) {
    %c3_i32 = arith.constant 3 : i32
    %0 = arith.muli %arg0, %c3_i32 : i32
    %1 = arith.addi %0, %arg1 : i32
    %c0_i32 = arith.constant 0 : i32
    %c0_i32_0 = arith.constant 0 : i32
    return %1, %c0_i32 : i32, i32
  }
}

</mosaic_0001>

<llo_original>
// kernel: tile.13
$region0: #{tile.13}
  #allocation0 [shape = 's32[1]{0}', space=sflag, size = 0x4, scoped, tag = 'scoped memory for tile.13']
  %s0 = inlined_call_operand.vmem [shape: f32[32], index: 0, kind: input, shape index: {}]
  %s1 = inlined_call_operand.vmem [shape: f32[4,32], index: 1, kind: output, shape index: {}]
  // Predicated region
  $region2: #{tile.13} parent=0 // pred_check
    _
  $region3: #{tile.13} parent=0 // pred_check_branch
    %3 = sbr.rel (0) target = $region5
  $region4: #{tile.13} parent=0 // pred_region
    _
  $region5: #{tile.13} parent=0 // pred_fallthru
    _
  %v4 = vld [vmem:[%s0] ss:$0 sm:$0xff]
  %5 = vst [vmem:[%s1] sm:$0xf] %v4

// kernel: mul.15
$region0: #{mul.15}
  %s0 = inlined_call_operand.vmem [shape: f32[4,32], index: 0, kind: input, shape index: {}]
  %s1 = inlined_call_operand.vmem [shape: f32[128], index: 1, kind: output, shape index: {}]
  $region1: #{mul.15} parent=0
    #allocation0 [shape = 'u8[4096]{0}', space=vmem, size = 0x1000, scoped, tag = 'scoped mem for output reshape']
    #allocation1 [shape = 'u8[4096]{0}', space=vmem, size = 0x1000, scoped, tag = 'scoped mem for input reshape']
    %s3 = ssub.s32 16, 1
    %v4 = vld [vmem:[%s0] sm:%s3]
    %5 = vst [vmem:[#allocation1] sm:%s3] %v4
    %v6 = vld [vmem:[#allocation1] sm:$0x1]
    %vm7 = vcmask 261120
    %8 = vst.msk [vmem:[#allocation0] sm:$0x1] %vm7, %v6
    %s9 = scalar_lea.vmem [#allocation1], 3
    %v10 = vld [vmem:[%s9] sm:$0x1]
    %11 = vrot.lane.b32.xlu0 %v10, 96
    %v12 = vpop.permute.xlu0 %11
    %vm13 = vcmask 1048320
    %14 = vst.msk [vmem:[#allocation0] sm:$0x1] %vm13, %v12
    %s15 = scalar_lea.vmem [#allocation1], 2
    %v16 = vld [vmem:[%s15] sm:$0x1]
    %17 = vrot.lane.b32.xlu0 %v16, 64
    %v18 = vpop.permute.xlu0 %17
    %vm19 = vcmask 785920
    %20 = vst.msk [vmem:[#allocation0] sm:$0x1] %vm19, %v18
    %s21 = scalar_lea.vmem [#allocation1], 1
    %v22 = vld [vmem:[%s21] sm:$0x1]
    %23 = vrot.lane.b32.xlu0 %v22, 32
    %v24 = vpop.permute.xlu0 %23
    %vm25 = vcmask 523520
    %26 = vst.msk [vmem:[#allocation0] sm:$0x1] %vm25, %v24
    %s28 = ssub.s32 2, 1
    %v29 = vld [vmem:[#allocation0] sm:%s28]
    %s31 = ssub.s32 2, 1
    %32 = vst [vmem:[%s1] sm:%s31] %v29

// kernel: _lambda_.1
$region0: #{_lambda_.1}
  #allocation0 [shape = 'u32[]', space=smem, size = 0x4, offset = 0x4, fixed_abs, tag = 'smem constant byte address 0x4 - core index']
  #allocation1 [shape = 'u32[72,128]{1,0:T(1,128)}', space=vmem, size = 0x9000, scoped, tag = 'internal scratch']
  %s0 = inlined_call_operand.vmem [shape: bf16[2,18,17,4], index: 0, kind: input, shape index: {}]
  %s1 = inlined_call_operand.vmem [shape: bf16[2,18,17,4], index: 1, kind: input, shape index: {}]
  %s2 = inlined_call_operand.vmem [shape: bf16[4,4,128], index: 2, kind: input, shape index: {}]
  %s3 = inlined_call_operand.vmem [shape: bf16[576,128], index: 3, kind: output, shape index: {0}]
  %s4 = inlined_call_operand.vmem [shape: f32[48,128], index: 4, kind: output, shape index: {1}]
  %5 = xla_tuple %s3, %s4
  %s6 = sld [smem:[#allocation0]]
  $region53: #{_lambda_.1} parent=0
    _
  %s8 = ssub.s32 1, %s6
  %s9 = scalar_select 0, %s8, %s6
  loop: start=0, step=1, limit=8
  $region2: #{_lambda_.1} parent=0 // loop_pre_header
    _
  $region3: #{_lambda_.1} parent=0 // loop_header
    %s11 = sphi 0, %s15
    %p12 = scmp.ge.s32.totalorder %s11, 8
    %s18 = sphi 0, %s30
    %s19 = sphi 0, %s26
    %s20 = sphi 0, %s18
    %s21 = sphi 0, %s19
    %s22 = sphi 0, %s20
    %s23 = sphi 0, %s21
    %s35 = sphi 0, %s37
    %s38 = sphi 0, %s35
    %s39 = sphi 0, %s38
    %s55 = sphi 0, %s39
    %s63 = sphi 0, %s65
    %s66 = sphi 0, %s63
    %s67 = sphi 0, %s66
    %s83 = sphi 0, %s67
    %s87 = sphi 0, %s87
    %s89 = sphi 0, %s87
    %s90 = sphi 0, %s89
    %s104 = sphi 0, %s90
    %s114 = sphi 0, %s116
    %s117 = sphi 0, %s114
    %s118 = sphi 0, %s117
    %s134 = sphi 0, %s118
    %s144 = sphi 0, %s146
    %s147 = sphi 0, %s144
    %s148 = sphi 0, %s147
    %s164 = sphi 0, %s148
  $region4: #{_lambda_.1} parent=0 // loop_header_branch
    %14 = sbr.rel (%p12) target = $region8
  $region5: #{_lambda_.1} parent=0 // loop_body
    %s16 = ssub.s32 %s11, 1
    %s17 = ssub.s32 %s11, 2
    %s24 = sadd.s32 1, %s19
    %p25 = scmp.ge.s32.totalorder %s24, 3
    %s26 = scalar_select %p25, 0, %s24
    %s27 = sadd.s32 1, %s18
    %s28 = scalar_select %p25, %s27, %s18
    %p29 = scmp.ge.s32.totalorder %s28, 2
    %s30 = scalar_select %p29, 0, %s28
    %s31 = ssub.s32 %s18, %s30
    %s32 = ssub.s32 %s19, %s26
    %s33 = sor.u32 %s31, %s32
    %p34 = scmp.eq.s32.totalorder %s33, 0
    %s36 = sadd.s32 %s35, 1
    %s37 = scalar_select %p34, %s35, %s36
    %p40 = pneg %p34
    %p41 = scmp.eq.s32.totalorder %s11, 5
    %p42 = por %p40, %p41
    %p43 = scmp.ne.s32.totalorder %s35, %s38
    %p44 = scmp.eq.s32.totalorder %s11, 0
    %p45 = por %p43, %p44
    %p46 = scmp.ne.s32.totalorder %s35, %s38
    %p47 = scmp.eq.s32.totalorder %s16, 5
    %p48 = por %p46, %p47
    %p49 = scmp.ne.s32.totalorder %s38, %s39
    %p50 = scmp.eq.s32.totalorder %s16, 0
    %p51 = por %p49, %p50
    %p52 = scmp.ne.s32.totalorder %s38, %s39
    %p53 = scmp.eq.s32.totalorder %s17, 5
    %p54 = por %p52, %p53
    %p56 = scmp.ne.s32.totalorder %s39, %s55
    %p57 = scmp.eq.s32.totalorder %s17, 0
    %p58 = por %p56, %p57
    %s59 = ssub.s32 %s18, %s30
    %s60 = ssub.s32 %s19, %s26
    %s61 = sor.u32 %s59, %s60
    %p62 = scmp.eq.s32.totalorder %s61, 0
    %s64 = sadd.s32 %s63, 1
    %s65 = scalar_select %p62, %s63, %s64
    %p68 = pneg %p62
    %p69 = scmp.eq.s32.totalorder %s11, 5
    %p70 = por %p68, %p69
    %p71 = scmp.ne.s32.totalorder %s63, %s66
    %p72 = scmp.eq.s32.totalorder %s11, 0
    %p73 = por %p71, %p72
    %p74 = scmp.ne.s32.totalorder %s63, %s66
    %p75 = scmp.eq.s32.totalorder %s16, 5
    %p76 = por %p74, %p75
    %p77 = scmp.ne.s32.totalorder %s66, %s67
    %p78 = scmp.eq.s32.totalorder %s16, 0
    %p79 = por %p77, %p78
    %p80 = scmp.ne.s32.totalorder %s66, %s67
    %p81 = scmp.eq.s32.totalorder %s17, 5
    %p82 = por %p80, %p81
    %p84 = scmp.ne.s32.totalorder %s67, %s83
    %p85 = scmp.eq.s32.totalorder %s17, 0
    %p86 = por %p84, %p85
    %s88 = sadd.s32 %s87, 1
    %p91 = scmp.eq.s32.totalorder %s11, 5
    %p92 = scmp.ne.s32.totalorder %s87, %s89
    %p93 = scmp.eq.s32.totalorder %s11, 0
    %p94 = por %p92, %p93
    %p95 = scmp.ne.s32.totalorder %s87, %s89
    %p96 = scmp.eq.s32.totalorder %s16, 5
    %p97 = por %p95, %p96
    %p98 = scmp.ne.s32.totalorder %s89, %s90
    %p99 = scmp.eq.s32.totalorder %s16, 0
    %p100 = por %p98, %p99
    %p101 = scmp.ne.s32.totalorder %s89, %s90
    %p102 = scmp.eq.s32.totalorder %s17, 5
    %p103 = por %p101, %p102
    %p105 = scmp.ne.s32.totalorder %s90, %s104
    %p106 = scmp.eq.s32.totalorder %s17, 0
    %p107 = por %p105, %p106
    %s108 = smul.u32 %s18, 3
    %s109 = sadd.s32 %s108, %s19
    %s110 = smul.u32 %s30, 3
    %s111 = sadd.s32 %s110, %s26
    %s112 = ssub.s32 %s109, %s111
    %p113 = scmp.eq.s32.totalorder %s112, 0
    %s115 = sadd.s32 %s114, 1
    %s116 = scalar_select %p113, %s114, %s115
    %p119 = pneg %p113
    %p120 = scmp.eq.s32.totalorder %s11, 5
    %p121 = por %p119, %p120
    %p122 = scmp.ne.s32.totalorder %s114, %s117
    %p123 = scmp.eq.s32.totalorder %s11, 0
    %p124 = por %p122, %p123
    %p125 = scmp.ne.s32.totalorder %s114, %s117
    %p126 = scmp.eq.s32.totalorder %s16, 5
    %p127 = por %p125, %p126
    %p128 = scmp.ne.s32.totalorder %s117, %s118
    %p129 = scmp.eq.s32.totalorder %s16, 0
    %p130 = por %p128, %p129
    %p131 = scmp.ne.s32.totalorder %s117, %s118
    %p132 = scmp.eq.s32.totalorder %s17, 5
    %p133 = por %p131, %p132
    %p135 = scmp.ne.s32.totalorder %s118, %s134
    %p136 = scmp.eq.s32.totalorder %s17, 0
    %p137 = por %p135, %p136
    %s138 = smul.u32 %s18, 3
    %s139 = sadd.s32 %s138, %s19
    %s140 = smul.u32 %s30, 3
    %s141 = sadd.s32 %s140, %s26
    %s142 = ssub.s32 %s139, %s141
    %p143 = scmp.eq.s32.totalorder %s142, 0
    %s145 = sadd.s32 %s144, 1
    %s146 = scalar_select %p143, %s144, %s145
    %p149 = pneg %p143
    %p150 = scmp.eq.s32.totalorder %s11, 5
    %p151 = por %p149, %p150
    %p152 = scmp.ne.s32.totalorder %s144, %s147
    %p153 = scmp.eq.s32.totalorder %s11, 0
    %p154 = por %p152, %p153
    %p155 = scmp.ne.s32.totalorder %s144, %s147
    %p156 = scmp.eq.s32.totalorder %s16, 5
    %p157 = por %p155, %p156
    %p158 = scmp.ne.s32.totalorder %s147, %s148
    %p159 = scmp.eq.s32.totalorder %s16, 0
    %p160 = por %p158, %p159
    %p161 = scmp.ne.s32.totalorder %s147, %s148
    %p162 = scmp.eq.s32.totalorder %s17, 5
    %p163 = por %p161, %p162
    %p165 = scmp.ne.s32.totalorder %s148, %s164
    %p166 = scmp.eq.s32.totalorder %s17, 0
    %p167 = por %p165, %p166
    %p168 = scmp.le.s32.totalorder 1, %s11
    %p169 = scmp.lt.s32.totalorder %s11, 7
    %p170 = pnand %p168, %p169
    %p171 = pneg %p170
    // Predicated region
    $region9: #{_lambda_.1} parent=5 // pred_check
      _
    $region10: #{_lambda_.1} parent=5 // pred_check_branch
      %173 = sbr.rel (%p170) target = $region12
    $region11: #{_lambda_.1} parent=5 // pred_region
      %s174 = ssub.s32 %s11, 1
      // Predicated region
      $region13: #{_lambda_.1} parent=11 // pred_check
        %p175 = pneg %p100
      $region14: #{_lambda_.1} parent=11 // pred_check_branch
        %177 = sbr.rel (%p175) target = $region16
      $region15: #{_lambda_.1} parent=11 // pred_region
        _
      $region16: #{_lambda_.1} parent=11 // pred_fallthru
        _
    $region12: #{_lambda_.1} parent=5 // pred_fallthru
      _
    %p178 = scmp.lt.s32.totalorder %s11, 6
    // Predicated region
    $region17: #{_lambda_.1} parent=5 // pred_check
      %p179 = pneg %p178
    $region18: #{_lambda_.1} parent=5 // pred_check_branch
      %181 = sbr.rel (%p179) target = $region20
    $region19: #{_lambda_.1} parent=5 // pred_region
      // Predicated region
      $region21: #{_lambda_.1} parent=19 // pred_check
        %p182 = pneg %p45
      $region22: #{_lambda_.1} parent=19 // pred_check_branch
        %184 = sbr.rel (%p182) target = $region24
      $region23: #{_lambda_.1} parent=19 // pred_region
        %s185 = smul.u32 6, %s19
        %p186 = scmp.lt.s32.totalorder %s18, 1
        %s187 = scalar_select %p186, %s18, 1
        %p188 = scmp.lt.s32.totalorder %s185, 17
        %s189 = scalar_select %p188, %s185, 17
        %s190 = smul.addr %s189, 3
        %s191 = smul.addr %s187, 54
        %s192 = sadd.s32 %s190, %s191
        %s193 = smul.addr %s192, 4
        %s194 = scalar_lea.vmem %s0, %s193
        %s195 = smul.u32 6, %s19
      $region24: #{_lambda_.1} parent=19 // pred_fallthru
        _
      // Predicated region
      $region25: #{_lambda_.1} parent=19 // pred_check
        %p196 = pneg %p73
      $region26: #{_lambda_.1} parent=19 // pred_check_branch
        %198 = sbr.rel (%p196) target = $region28
      $region27: #{_lambda_.1} parent=19 // pred_region
        %s199 = smul.u32 6, %s19
        %p200 = scmp.lt.s32.totalorder %s18, 1
        %s201 = scalar_select %p200, %s18, 1
        %p202 = scmp.lt.s32.totalorder %s199, 17
        %s203 = scalar_select %p202, %s199, 17
        %s204 = smul.addr %s203, 3
        %s205 = smul.addr %s201, 54
        %s206 = sadd.s32 %s204, %s205
        %s207 = smul.addr %s206, 4
        %s208 = scalar_lea.vmem %s1, %s207
        %s209 = smul.u32 6, %s19
      $region28: #{_lambda_.1} parent=19 // pred_fallthru
        _
    $region20: #{_lambda_.1} parent=5 // pred_fallthru
      _
    %p210 = scmp.le.s32.totalorder 1, %s11
    %p211 = scmp.lt.s32.totalorder %s11, 7
    %p212 = pnand %p210, %p211
    %p213 = pneg %p212
    // Predicated region
    $region29: #{_lambda_.1} parent=5 // pred_check
      _
    $region30: #{_lambda_.1} parent=5 // pred_check_branch
      %215 = sbr.rel (%p212) target = $region32
    $region31: #{_lambda_.1} parent=5 // pred_region
      %s216 = ssub.s32 %s11, 1
      %s217 = smul.u32 6, %s21
      %p218 = scmp.lt.s32.totalorder %s20, 1
      %s219 = scalar_select %p218, %s20, 1
      %p220 = scmp.lt.s32.totalorder %s217, 17
      %s221 = scalar_select %p220, %s217, 17
      %s222 = smul.addr %s221, 3
      %s223 = smul.addr %s219, 54
      %s224 = sadd.s32 %s222, %s223
      %s225 = smul.addr %s224, 4
      %s226 = scalar_lea.vmem %s0, %s225
      %p227 = pneg %p51
      %p228 = pneg %p48
      %s229 = smul.u32 6, %s21
      %p230 = scmp.lt.s32.totalorder %s20, 1
      %s231 = scalar_select %p230, %s20, 1
      %p232 = scmp.lt.s32.totalorder %s229, 17
      %s233 = scalar_select %p232, %s229, 17
      %s234 = smul.addr %s233, 3
      %s235 = smul.addr %s231, 54
      %s236 = sadd.s32 %s234, %s235
      %s237 = smul.addr %s236, 4
      %s238 = scalar_lea.vmem %s1, %s237
      %p239 = pneg %p79
      %p240 = pneg %p76
      %p241 = pneg %p100
      %p242 = pneg %p97
      %p243 = pneg %p130
      %p244 = pneg %p127
      %s245 = smul.u32 %s20, 3
      %s246 = sadd.s32 %s245, %s21
      %s247 = smul.u32 12, %s246
      %p248 = scmp.lt.s32.totalorder %s247, 71
      %s249 = scalar_select %p248, %s247, 71
      %s250 = smul.addr %s249, 4
      %s251 = scalar_lea.vmem %s3, %s250
      %p252 = pneg %p160
      %p253 = pneg %p157
      %s254 = smul.u32 %s20, 3
      %s255 = sadd.s32 %s254, %s21
      %p256 = scmp.lt.s32.totalorder %s255, 5
      %s257 = scalar_select %p256, %s255, 5
      %s258 = smul.addr %s257, 8
      %s259 = scalar_lea.vmem %s4, %s258
      %s260 = smul.u32 6, %s21
      %p261 = scmp.lt.s32.totalorder %s20, 1
      %s262 = scalar_select %p261, %s20, 1
      %p263 = scmp.lt.s32.totalorder %s260, 17
      %s264 = scalar_select %p263, %s260, 17
      %s265 = smul.addr %s264, 3
      %s266 = smul.addr %s262, 54
      %s267 = sadd.s32 %s265, %s266
      %s268 = smul.addr %s267, 4
      %s269 = scalar_lea.vmem %s0, %s268
      %s270 = smul.u32 6, %s21
      %s271 = smul.u32 6, %s21
      %p272 = scmp.lt.s32.totalorder %s20, 1
      %s273 = scalar_select %p272, %s20, 1
      %p274 = scmp.lt.s32.totalorder %s271, 17
      %s275 = scalar_select %p274, %s271, 17
      %s276 = smul.addr %s275, 3
      %s277 = smul.addr %s273, 54
      %s278 = sadd.s32 %s276, %s277
      %s279 = smul.addr %s278, 4
      %s280 = scalar_lea.vmem %s1, %s279
      %s281 = smul.u32 6, %s21
      %s282 = smul.u32 %s20, 3
      %s283 = sadd.s32 %s282, %s21
      %s284 = smul.u32 12, %s283
      %p285 = scmp.lt.s32.totalorder %s284, 71
      %s286 = scalar_select %p285, %s284, 71
      %s287 = smul.addr %s286, 4
      %s288 = scalar_lea.vmem %s3, %s287
      %s289 = smul.u32 %s20, 3
      %s290 = sadd.s32 %s289, %s21
      %s291 = smul.u32 12, %s290
      %s292 = smul.u32 %s20, 3
      %s293 = sadd.s32 %s292, %s21
      %p294 = scmp.lt.s32.totalorder %s293, 5
      %s295 = scalar_select %p294, %s293, 5
      %s296 = smul.addr %s295, 8
      %s297 = scalar_lea.vmem %s4, %s296
      %s298 = smul.u32 %s20, 3
      %s299 = sadd.s32 %s298, %s21
      %v301 = vld [vmem:[%s269] sm:$0xf]
      %v302 = vld [vmem:[%s269 + $0x4] sm:$0xf]
      %v303 = vld [vmem:[%s269 + $0x8] sm:$0x1]
      %v304 = vld [vmem:[%s269 + $0xc] sm:$0xf]
      %v305 = vld [vmem:[%s269 + $0x10] sm:$0xf]
      %v306 = vld [vmem:[%s269 + $0x14] sm:$0x1]
      %v307 = vld [vmem:[%s269 + $0x18] sm:$0xf]
      %v308 = vld [vmem:[%s269 + $0x1c] sm:$0xf]
      %v309 = vld [vmem:[%s269 + $0x20] sm:$0x1]
      %v310 = vld [vmem:[%s269 + $0x24] sm:$0xf]
      %v311 = vld [vmem:[%s269 + $0x28] sm:$0xf]
      %v312 = vld [vmem:[%s269 + $0x2c] sm:$0x1]
      %v313 = vld [vmem:[%s269 + $0x30] sm:$0xf]
      %v314 = vld [vmem:[%s269 + $0x34] sm:$0xf]
      %v315 = vld [vmem:[%s269 + $0x38] sm:$0x1]
      %v316 = vld [vmem:[%s269 + $0x3c] sm:$0xf]
      %v317 = vld [vmem:[%s269 + $0x40] sm:$0xf]
      %v318 = vld [vmem:[%s269 + $0x44] sm:$0x1]
      %v319 = vld [vmem:[%s280] sm:$0xf]
      %v320 = vld [vmem:[%s280 + $0x4] sm:$0xf]
      %v321 = vld [vmem:[%s280 + $0x8] sm:$0x1]
      %v322 = vld [vmem:[%s280 + $0xc] sm:$0xf]
      %v323 = vld [vmem:[%s280 + $0x10] sm:$0xf]
      %v324 = vld [vmem:[%s280 + $0x14] sm:$0x1]
      %v325 = vld [vmem:[%s280 + $0x18] sm:$0xf]
      %v326 = vld [vmem:[%s280 + $0x1c] sm:$0xf]
      %v327 = vld [vmem:[%s280 + $0x20] sm:$0x1]
      %v328 = vld [vmem:[%s280 + $0x24] sm:$0xf]
      %v329 = vld [vmem:[%s280 + $0x28] sm:$0xf]
      %v330 = vld [vmem:[%s280 + $0x2c] sm:$0x1]
      %v331 = vld [vmem:[%s280 + $0x30] sm:$0xf]
      %v332 = vld [vmem:[%s280 + $0x34] sm:$0xf]
      %v333 = vld [vmem:[%s280 + $0x38] sm:$0x1]
      %v334 = vld [vmem:[%s280 + $0x3c] sm:$0xf]
      %v335 = vld [vmem:[%s280 + $0x40] sm:$0xf]
      %v336 = vld [vmem:[%s280 + $0x44] sm:$0x1]
      %v337 = vld [vmem:[%s2] sm:$0x3]
      %vm338 = vsmask.f32 3328
      %vm339 = vsmask.f32 7440
      %vm340 = vmor %vm338, %vm339
      %v342 = vshrl.u32 %v301, 16
      %v344 = vrot.slane %v342, 4
      %v345 = vshll.u32 %v301, 16
      %v347 = vrot.slane %v345, 5
      %v348 = vor.u32 %v344, %v347
      %v349 = vrot.slane %v348, 4
      %v351 = vshll.u32 %v302, 16
      %v353 = vrot.slane %v351, 5
      %v354 = vsel %vm340, %v349, %v353
      %v355 = vshrl.u32 %v302, 16
      %v357 = vrot.slane %v355, 4
      %v358 = vor.u32 %v357, %v353
      %v359 = vrot.slane %v358, 4
      %v361 = vshll.u32 %v303, 16
      %v363 = vrot.slane %v361, 5
      %v364 = vsel %vm340, %v359, %v363
      %v366 = vshrl.u32 %v304, 16
      %v368 = vrot.slane %v366, 4
      %v369 = vshll.u32 %v304, 16
      %v371 = vrot.slane %v369, 5
      %v372 = vor.u32 %v368, %v371
      %v373 = vrot.slane %v372, 4
      %v375 = vshll.u32 %v305, 16
      %v377 = vrot.slane %v375, 5
      %v378 = vsel %vm340, %v373, %v377
      %v379 = vshrl.u32 %v305, 16
      %v381 = vrot.slane %v379, 4
      %v382 = vor.u32 %v381, %v377
      %v383 = vrot.slane %v382, 4
      %v385 = vshll.u32 %v306, 16
      %v387 = vrot.slane %v385, 5
      %v388 = vsel %vm340, %v383, %v387
      %v390 = vshrl.u32 %v307, 16
      %v392 = vrot.slane %v390, 4
      %v393 = vshll.u32 %v307, 16
      %v395 = vrot.slane %v393, 5
      %v396 = vor.u32 %v392, %v395
      %v397 = vrot.slane %v396, 4
      %v399 = vshll.u32 %v308, 16
      %v401 = vrot.slane %v399, 5
      %v402 = vsel %vm340, %v397, %v401
      %v403 = vshrl.u32 %v308, 16
      %v405 = vrot.slane %v403, 4
      %v406 = vor.u32 %v405, %v401
      %v407 = vrot.slane %v406, 4
      %v409 = vshll.u32 %v309, 16
      %v411 = vrot.slane %v409, 5
      %v412 = vsel %vm340, %v407, %v411
      %v414 = vshrl.u32 %v310, 16
      %v416 = vrot.slane %v414, 4
      %v417 = vshll.u32 %v310, 16
      %v419 = vrot.slane %v417, 5
      %v420 = vor.u32 %v416, %v419
      %v421 = vrot.slane %v420, 4
      %v423 = vshll.u32 %v311, 16
      %v425 = vrot.slane %v423, 5
      %v426 = vsel %vm340, %v421, %v425
      %v427 = vshrl.u32 %v311, 16
      %v429 = vrot.slane %v427, 4
      %v430 = vor.u32 %v429, %v425
      %v431 = vrot.slane %v430, 4
      %v433 = vshll.u32 %v312, 16
      %v435 = vrot.slane %v433, 5
      %v436 = vsel %vm340, %v431, %v435
      %v438 = vshrl.u32 %v313, 16
      %v440 = vrot.slane %v438, 4
      %v441 = vshll.u32 %v313, 16
      %v443 = vrot.slane %v441, 5
      %v444 = vor.u32 %v440, %v443
      %v445 = vrot.slane %v444, 4
      %v447 = vshll.u32 %v314, 16
      %v449 = vrot.slane %v447, 5
      %v450 = vsel %vm340, %v445, %v449
      %v451 = vshrl.u32 %v314, 16
      %v453 = vrot.slane %v451, 4
      %v454 = vor.u32 %v453, %v449
      %v455 = vrot.slane %v454, 4
      %v457 = vshll.u32 %v315, 16
      %v459 = vrot.slane %v457, 5
      %v460 = vsel %vm340, %v455, %v459
      %v462 = vshrl.u32 %v316, 16
      %v464 = vrot.slane %v462, 4
      %v465 = vshll.u32 %v316, 16
      %v467 = vrot.slane %v465, 5
      %v468 = vor.u32 %v464, %v467
      %v469 = vrot.slane %v468, 4
      %v471 = vshll.u32 %v317, 16
      %v473 = vrot.slane %v471, 5
      %v474 = vsel %vm340, %v469, %v473
      %v475 = vshrl.u32 %v317, 16
      %v477 = vrot.slane %v475, 4
      %v478 = vor.u32 %v477, %v473
      %v479 = vrot.slane %v478, 4
      %v481 = vshll.u32 %v318, 16
      %v483 = vrot.slane %v481, 5
      %v484 = vsel %vm340, %v479, %v483
      %s485 = scalar_lea.vmem %s2, 2
      %v486 = vld [vmem:[%s485] sm:$0x3]
      %v487 = vunpack.c.l.b16 %v354
      %v488 = vunpack.c.l.b16 %v364
      %v489 = vunpack.c.l.b16 %v378
      %v490 = vunpack.c.l.b16 %v388
      %v491 = vunpack.c.l.b16 %v402
      %v492 = vunpack.c.l.b16 %v412
      %v493 = vunpack.c.l.b16 %v426
      %v494 = vunpack.c.l.b16 %v436
      %v495 = vunpack.c.l.b16 %v450
      %v496 = vunpack.c.l.b16 %v460
      %v497 = vunpack.c.l.b16 %v474
      %v498 = vunpack.c.l.b16 %v484
      %v499 = vpack.c.b16 %v488, %v487
      %v500 = vpack.c.b16 %v490, %v489
      %v501 = vpack.c.b16 %v492, %v491
      %v502 = vpack.c.b16 %v494, %v493
      %v503 = vpack.c.b16 %v496, %v495
      %v504 = vpack.c.b16 %v498, %v497
      %vm505 = vcmask 31744
      %v507 = vsel %vm505, %v499, 0
      %v510 = vsel %vm505, %v500, 0
      %v513 = vsel %vm505, %v501, 0
      %v516 = vsel %vm505, %v502, 0
      %v519 = vsel %vm505, %v503, 0
      %v522 = vsel %vm505, %v504, 0
      %vm524 = vcmask 1041408
      %v526 = vsel %vm524, %v486, 0
      %528 = vmatpush.bf16.msra.mxu0 0
      %529 = vmatpush.bf16.msra.mxu0 0
      %530 = vmatpush.bf16.msra.mxu0 0
      %531 = vmatpush.bf16.msra.mxu0 0
      %532 = vmatpush.bf16.msra.mxu0 0
      %533 = vmatpush.bf16.msra.mxu0 0
      %534 = vmatpush.bf16.msra.mxu0 0
      %535 = vmatpush.bf16.msra.mxu0 %v526
      %536 = vmatmul.bf16.gmra.mxu0 %v507
      %v537 = vpop.f32.mrf.mxu0
      %v538 = vadd.f32 0.0, %v537
      %v539 = vpop.f32.mrf.mxu0
      %v540 = vadd.f32 0.0, %v539
      %541 = vmatmul.bf16.gmra.mxu0 %v510
      %v542 = vpop.f32.mrf.mxu0
      %v543 = vadd.f32 0.0, %v542
      %v544 = vpop.f32.mrf.mxu0
      %v545 = vadd.f32 0.0, %v544
      %546 = vmatmul.bf16.gmra.mxu0 %v513
      %v547 = vpop.f32.mrf.mxu0
      %v548 = vadd.f32 0.0, %v547
      %v549 = vpop.f32.mrf.mxu0
      %v550 = vadd.f32 0.0, %v549
      %551 = vmatmul.bf16.gmra.mxu0 %v516
      %v552 = vpop.f32.mrf.mxu0
      %v553 = vadd.f32 0.0, %v552
      %v554 = vpop.f32.mrf.mxu0
      %v555 = vadd.f32 0.0, %v554
      %556 = vmatmul.bf16.gmra.mxu0 %v519
      %v557 = vpop.f32.mrf.mxu0
      %v558 = vadd.f32 0.0, %v557
      %v559 = vpop.f32.mrf.mxu0
      %v560 = vadd.f32 0.0, %v559
      %561 = vmatmul.bf16.gmra.mxu0 %v522
      %v562 = vpop.f32.mrf.mxu0
      %v563 = vadd.f32 0.0, %v562
      %v564 = vpop.f32.mrf.mxu0
      %v565 = vadd.f32 0.0, %v564
      %566 = vdwg.mxu0
      %v579 = vunpack.c.l.b16 %v301
      %v580 = vunpack.c.l.b16 %v302
      %v581 = vunpack.c.l.b16 %v304
      %v582 = vunpack.c.l.b16 %v305
      %v583 = vunpack.c.l.b16 %v307
      %v584 = vunpack.c.l.b16 %v308
      %v585 = vunpack.c.l.b16 %v310
      %v586 = vunpack.c.l.b16 %v311
      %v587 = vunpack.c.l.b16 %v313
      %v588 = vunpack.c.l.b16 %v314
      %v589 = vunpack.c.l.b16 %v316
      %v590 = vunpack.c.l.b16 %v317
      %v591 = vpack.c.b16 %v580, %v579
      %v592 = vpack.c.b16 %v582, %v581
      %v593 = vpack.c.b16 %v584, %v583
      %v594 = vpack.c.b16 %v586, %v585
      %v595 = vpack.c.b16 %v588, %v587
      %v596 = vpack.c.b16 %v590, %v589
      %v598 = vsel %vm505, %v591, 0
      %v601 = vsel %vm505, %v592, 0
      %v604 = vsel %vm505, %v593, 0
      %v607 = vsel %vm505, %v594, 0
      %v610 = vsel %vm505, %v595, 0
      %v613 = vsel %vm505, %v596, 0
      %v616 = vsel %vm524, %v337, 0
      %618 = vmatpush.bf16.msra.mxu0 0
      %619 = vmatpush.bf16.msra.mxu0 0
      %620 = vmatpush.bf16.msra.mxu0 0
      %621 = vmatpush.bf16.msra.mxu0 0
      %622 = vmatpush.bf16.msra.mxu0 0
      %623 = vmatpush.bf16.msra.mxu0 0
      %624 = vmatpush.bf16.msra.mxu0 0
      %625 = vmatpush.bf16.msra.mxu0 %v616
      %626 = vmatmul.bf16.gmra.mxu0 %v598
      %v627 = vpop.f32.mrf.mxu0
      %v628 = vadd.f32 %v538, %v627
      %v629 = vpop.f32.mrf.mxu0
      %v630 = vadd.f32 %v540, %v629
      %631 = vmatmul.bf16.gmra.mxu0 %v601
      %v632 = vpop.f32.mrf.mxu0
      %v633 = vadd.f32 %v543, %v632
      %v634 = vpop.f32.mrf.mxu0
      %v635 = vadd.f32 %v545, %v634
      %636 = vmatmul.bf16.gmra.mxu0 %v604
      %v637 = vpop.f32.mrf.mxu0
      %v638 = vadd.f32 %v548, %v637
      %v639 = vpop.f32.mrf.mxu0
      %v640 = vadd.f32 %v550, %v639
      %641 = vmatmul.bf16.gmra.mxu0 %v607
      %v642 = vpop.f32.mrf.mxu0
      %v643 = vadd.f32 %v553, %v642
      %v644 = vpop.f32.mrf.mxu0
      %v645 = vadd.f32 %v555, %v644
      %646 = vmatmul.bf16.gmra.mxu0 %v610
      %v647 = vpop.f32.mrf.mxu0
      %v648 = vadd.f32 %v558, %v647
      %v649 = vpop.f32.mrf.mxu0
      %v650 = vadd.f32 %v560, %v649
      %651 = vmatmul.bf16.gmra.mxu0 %v613
      %v652 = vpop.f32.mrf.mxu0
      %v653 = vadd.f32 %v563, %v652
      %v654 = vpop.f32.mrf.mxu0
      %v655 = vadd.f32 %v565, %v654
      %656 = vdwg.mxu0
      %s657 = scalar_lea.vmem %s2, 4
      %v658 = vld [vmem:[%s657] sm:$0x3]
      %v671 = vunpack.c.l.b16 %v319
      %v672 = vunpack.c.l.b16 %v320
      %v673 = vunpack.c.l.b16 %v322
      %v674 = vunpack.c.l.b16 %v323
      %v675 = vunpack.c.l.b16 %v325
      %v676 = vunpack.c.l.b16 %v326
      %v677 = vunpack.c.l.b16 %v328
      %v678 = vunpack.c.l.b16 %v329
      %v679 = vunpack.c.l.b16 %v331
      %v680 = vunpack.c.l.b16 %v332
      %v681 = vunpack.c.l.b16 %v334
      %v682 = vunpack.c.l.b16 %v335
      %v683 = vpack.c.b16 %v672, %v671
      %v684 = vpack.c.b16 %v674, %v673
      %v685 = vpack.c.b16 %v676, %v675
      %v686 = vpack.c.b16 %v678, %v677
      %v687 = vpack.c.b16 %v680, %v679
      %v688 = vpack.c.b16 %v682, %v681
      %v690 = vsel %vm505, %v683, 0
      %v693 = vsel %vm505, %v684, 0
      %v696 = vsel %vm505, %v685, 0
      %v699 = vsel %vm505, %v686, 0
      %v702 = vsel %vm505, %v687, 0
      %v705 = vsel %vm505, %v688, 0
      %v708 = vsel %vm524, %v658, 0
      %710 = vmatpush.bf16.msra.mxu0 0
      %711 = vmatpush.bf16.msra.mxu0 0
      %712 = vmatpush.bf16.msra.mxu0 0
      %713 = vmatpush.bf16.msra.mxu0 0
      %714 = vmatpush.bf16.msra.mxu0 0
      %715 = vmatpush.bf16.msra.mxu0 0
      %716 = vmatpush.bf16.msra.mxu0 0
      %717 = vmatpush.bf16.msra.mxu0 %v708
      %718 = vmatmul.bf16.gmra.mxu0 %v690
      %v719 = vpop.f32.mrf.mxu0
      %v720 = vadd.f32 0.0, %v719
      %v721 = vpop.f32.mrf.mxu0
      %v722 = vadd.f32 0.0, %v721
      %723 = vmatmul.bf16.gmra.mxu0 %v693
      %v724 = vpop.f32.mrf.mxu0
      %v725 = vadd.f32 0.0, %v724
      %v726 = vpop.f32.mrf.mxu0
      %v727 = vadd.f32 0.0, %v726
      %728 = vmatmul.bf16.gmra.mxu0 %v696
      %v729 = vpop.f32.mrf.mxu0
      %v730 = vadd.f32 0.0, %v729
      %v731 = vpop.f32.mrf.mxu0
      %v732 = vadd.f32 0.0, %v731
      %733 = vmatmul.bf16.gmra.mxu0 %v699
      %v734 = vpop.f32.mrf.mxu0
      %v735 = vadd.f32 0.0, %v734
      %v736 = vpop.f32.mrf.mxu0
      %v737 = vadd.f32 0.0, %v736
      %738 = vmatmul.bf16.gmra.mxu0 %v702
      %v739 = vpop.f32.mrf.mxu0
      %v740 = vadd.f32 0.0, %v739
      %v741 = vpop.f32.mrf.mxu0
      %v742 = vadd.f32 0.0, %v741
      %743 = vmatmul.bf16.gmra.mxu0 %v705
      %v744 = vpop.f32.mrf.mxu0
      %v745 = vadd.f32 0.0, %v744
      %v746 = vpop.f32.mrf.mxu0
      %v747 = vadd.f32 0.0, %v746
      %748 = vdwg.mxu0
      %v749 = vadd.f32 %v628, %v720
      %v750 = vadd.f32 %v630, %v722
      %v751 = vadd.f32 %v633, %v725
      %v752 = vadd.f32 %v635, %v727
      %v753 = vadd.f32 %v638, %v730
      %v754 = vadd.f32 %v640, %v732
      %v755 = vadd.f32 %v643, %v735
      %v756 = vadd.f32 %v645, %v737
      %v757 = vadd.f32 %v648, %v740
      %v758 = vadd.f32 %v650, %v742
      %v759 = vadd.f32 %v653, %v745
      %v760 = vadd.f32 %v655, %v747
      %v762 = vshrl.u32 %v319, 16
      %v764 = vrot.slane %v762, 4
      %v765 = vshll.u32 %v319, 16
      %v767 = vrot.slane %v765, 5
      %v768 = vor.u32 %v764, %v767
      %v769 = vrot.slane %v768, 4
      %v771 = vshll.u32 %v320, 16
      %v773 = vrot.slane %v771, 5
      %v774 = vsel %vm340, %v769, %v773
      %v775 = vshrl.u32 %v320, 16
      %v777 = vrot.slane %v775, 4
      %v778 = vor.u32 %v777, %v773
      %v779 = vrot.slane %v778, 4
      %v781 = vshll.u32 %v321, 16
      %v783 = vrot.slane %v781, 5
      %v784 = vsel %vm340, %v779, %v783
      %v786 = vshrl.u32 %v322, 16
      %v788 = vrot.slane %v786, 4
      %v789 = vshll.u32 %v322, 16
      %v791 = vrot.slane %v789, 5
      %v792 = vor.u32 %v788, %v791
      %v793 = vrot.slane %v792, 4
      %v795 = vshll.u32 %v323, 16
      %v797 = vrot.slane %v795, 5
      %v798 = vsel %vm340, %v793, %v797
      %v799 = vshrl.u32 %v323, 16
      %v801 = vrot.slane %v799, 4
      %v802 = vor.u32 %v801, %v797
      %v803 = vrot.slane %v802, 4
      %v805 = vshll.u32 %v324, 16
      %v807 = vrot.slane %v805, 5
      %v808 = vsel %vm340, %v803, %v807
      %v810 = vshrl.u32 %v325, 16
      %v812 = vrot.slane %v810, 4
      %v813 = vshll.u32 %v325, 16
      %v815 = vrot.slane %v813, 5
      %v816 = vor.u32 %v812, %v815
      %v817 = vrot.slane %v816, 4
      %v819 = vshll.u32 %v326, 16
      %v821 = vrot.slane %v819, 5
      %v822 = vsel %vm340, %v817, %v821
      %v823 = vshrl.u32 %v326, 16
      %v825 = vrot.slane %v823, 4
      %v826 = vor.u32 %v825, %v821
      %v827 = vrot.slane %v826, 4
      %v829 = vshll.u32 %v327, 16
      %v831 = vrot.slane %v829, 5
      %v832 = vsel %vm340, %v827, %v831
      %v834 = vshrl.u32 %v328, 16
      %v836 = vrot.slane %v834, 4
      %v837 = vshll.u32 %v328, 16
      %v839 = vrot.slane %v837, 5
      %v840 = vor.u32 %v836, %v839
      %v841 = vrot.slane %v840, 4
      %v843 = vshll.u32 %v329, 16
      %v845 = vrot.slane %v843, 5
      %v846 = vsel %vm340, %v841, %v845
      %v847 = vshrl.u32 %v329, 16
      %v849 = vrot.slane %v847, 4
      %v850 = vor.u32 %v849, %v845
      %v851 = vrot.slane %v850, 4
      %v853 = vshll.u32 %v330, 16
      %v855 = vrot.slane %v853, 5
      %v856 = vsel %vm340, %v851, %v855
      %v858 = vshrl.u32 %v331, 16
      %v860 = vrot.slane %v858, 4
      %v861 = vshll.u32 %v331, 16
      %v863 = vrot.slane %v861, 5
      %v864 = vor.u32 %v860, %v863
      %v865 = vrot.slane %v864, 4
      %v867 = vshll.u32 %v332, 16
      %v869 = vrot.slane %v867, 5
      %v870 = vsel %vm340, %v865, %v869
      %v871 = vshrl.u32 %v332, 16
      %v873 = vrot.slane %v871, 4
      %v874 = vor.u32 %v873, %v869
      %v875 = vrot.slane %v874, 4
      %v877 = vshll.u32 %v333, 16
      %v879 = vrot.slane %v877, 5
      %v880 = vsel %vm340, %v875, %v879
      %v882 = vshrl.u32 %v334, 16
      %v884 = vrot.slane %v882, 4
      %v885 = vshll.u32 %v334, 16
      %v887 = vrot.slane %v885, 5
      %v888 = vor.u32 %v884, %v887
      %v889 = vrot.slane %v888, 4
      %v891 = vshll.u32 %v335, 16
      %v893 = vrot.slane %v891, 5
      %v894 = vsel %vm340, %v889, %v893
      %v895 = vshrl.u32 %v335, 16
      %v897 = vrot.slane %v895, 4
      %v898 = vor.u32 %v897, %v893
      %v899 = vrot.slane %v898, 4
      %v901 = vshll.u32 %v336, 16
      %v903 = vrot.slane %v901, 5
      %v904 = vsel %vm340, %v899, %v903
      %s905 = scalar_lea.vmem %s2, 6
      %v906 = vld [vmem:[%s905] sm:$0x3]
      %v907 = vunpack.c.l.b16 %v774
      %v908 = vunpack.c.l.b16 %v784
      %v909 = vunpack.c.l.b16 %v798
      %v910 = vunpack.c.l.b16 %v808
      %v911 = vunpack.c.l.b16 %v822
      %v912 = vunpack.c.l.b16 %v832
      %v913 = vunpack.c.l.b16 %v846
      %v914 = vunpack.c.l.b16 %v856
      %v915 = vunpack.c.l.b16 %v870
      %v916 = vunpack.c.l.b16 %v880
      %v917 = vunpack.c.l.b16 %v894
      %v918 = vunpack.c.l.b16 %v904
      %v919 = vpack.c.b16 %v908, %v907
      %v920 = vpack.c.b16 %v910, %v909
      %v921 = vpack.c.b16 %v912, %v911
      %v922 = vpack.c.b16 %v914, %v913
      %v923 = vpack.c.b16 %v916, %v915
      %v924 = vpack.c.b16 %v918, %v917
      %v926 = vsel %vm505, %v919, 0
      %v929 = vsel %vm505, %v920, 0
      %v932 = vsel %vm505, %v921, 0
      %v935 = vsel %vm505, %v922, 0
      %v938 = vsel %vm505, %v923, 0
      %v941 = vsel %vm505, %v924, 0
      %v944 = vsel %vm524, %v906, 0
      %946 = vmatpush.bf16.msra.mxu0 0
      %947 = vmatpush.bf16.msra.mxu0 0
      %948 = vmatpush.bf16.msra.mxu0 0
      %949 = vmatpush.bf16.msra.mxu0 0
      %950 = vmatpush.bf16.msra.mxu0 0
      %951 = vmatpush.bf16.msra.mxu0 0
      %952 = vmatpush.bf16.msra.mxu0 0
      %953 = vmatpush.bf16.msra.mxu0 %v944
      %954 = vmatmul.bf16.gmra.mxu0 %v926
      %v955 = vpop.f32.mrf.mxu0
      %v956 = vadd.f32 0.0, %v955
      %v957 = vpop.f32.mrf.mxu0
      %v958 = vadd.f32 0.0, %v957
      %959 = vmatmul.bf16.gmra.mxu0 %v929
      %v960 = vpop.f32.mrf.mxu0
      %v961 = vadd.f32 0.0, %v960
      %v962 = vpop.f32.mrf.mxu0
      %v963 = vadd.f32 0.0, %v962
      %964 = vmatmul.bf16.gmra.mxu0 %v932
      %v965 = vpop.f32.mrf.mxu0
      %v966 = vadd.f32 0.0, %v965
      %v967 = vpop.f32.mrf.mxu0
      %v968 = vadd.f32 0.0, %v967
      %969 = vmatmul.bf16.gmra.mxu0 %v935
      %v970 = vpop.f32.mrf.mxu0
      %v971 = vadd.f32 0.0, %v970
      %v972 = vpop.f32.mrf.mxu0
      %v973 = vadd.f32 0.0, %v972
      %974 = vmatmul.bf16.gmra.mxu0 %v938
      %v975 = vpop.f32.mrf.mxu0
      %v976 = vadd.f32 0.0, %v975
      %v977 = vpop.f32.mrf.mxu0
      %v978 = vadd.f32 0.0, %v977
      %979 = vmatmul.bf16.gmra.mxu0 %v941
      %v980 = vpop.f32.mrf.mxu0
      %v981 = vadd.f32 0.0, %v980
      %v982 = vpop.f32.mrf.mxu0
      %v983 = vadd.f32 0.0, %v982
      %984 = vdwg.mxu0
      %v985 = vadd.f32 %v749, %v956
      %v986 = vadd.f32 %v750, %v958
      %v987 = vadd.f32 %v751, %v961
      %v988 = vadd.f32 %v752, %v963
      %v989 = vadd.f32 %v753, %v966
      %v990 = vadd.f32 %v754, %v968
      %v991 = vadd.f32 %v755, %v971
      %v992 = vadd.f32 %v756, %v973
      %v993 = vadd.f32 %v757, %v976
      %v994 = vadd.f32 %v758, %v978
      %v995 = vadd.f32 %v759, %v981
      %v996 = vadd.f32 %v760, %v983
      %v997 = vadd.f32 %v985, %v986
      %v998 = vadd.f32 %v997, %v987
      %v999 = vadd.f32 %v998, %v988
      %v1000 = vadd.f32 %v999, %v989
      %v1001 = vadd.f32 %v1000, %v990
      %v1002 = vadd.f32 %v1001, %v991
      %v1003 = vadd.f32 %v1002, %v992
      %v1004 = vadd.f32 %v1003, %v993
      %v1005 = vadd.f32 %v1004, %v994
      %v1006 = vadd.f32 %v1005, %v995
      %v1007 = vadd.f32 %v1006, %v996
      %v1008 = vrot.slane %v1007, 4
      %v1009 = vadd.f32 %v1007, %v1008
      %v1010 = vrot.slane %v1009, 2
      %v1011 = vadd.f32 %v1009, %v1010
      %v1012 = vrot.slane %v1011, 1
      %v1013 = vadd.f32 %v1011, %v1012
      %1014 = vst [vmem:[%s297] sm:$0x1] %v1013
      %v1015 = vmul.f32 %v985, %v985
      %v1016 = vmul.f32 %v986, %v986
      %v1017 = vmul.f32 %v987, %v987
      %v1018 = vmul.f32 %v988, %v988
      %v1019 = vmul.f32 %v989, %v989
      %v1020 = vmul.f32 %v990, %v990
      %v1021 = vmul.f32 %v991, %v991
      %v1022 = vmul.f32 %v992, %v992
      %v1023 = vmul.f32 %v993, %v993
      %v1024 = vmul.f32 %v994, %v994
      %v1025 = vmul.f32 %v995, %v995
      %v1026 = vmul.f32 %v996, %v996
      %v1027 = vadd.f32 %v1015, %v1016
      %v1028 = vadd.f32 %v1027, %v1017
      %v1029 = vadd.f32 %v1028, %v1018
      %v1030 = vadd.f32 %v1029, %v1019
      %v1031 = vadd.f32 %v1030, %v1020
      %v1032 = vadd.f32 %v1031, %v1021
      %v1033 = vadd.f32 %v1032, %v1022
      %v1034 = vadd.f32 %v1033, %v1023
      %v1035 = vadd.f32 %v1034, %v1024
      %v1036 = vadd.f32 %v1035, %v1025
      %v1037 = vadd.f32 %v1036, %v1026
      %v1038 = vrot.slane %v1037, 4
      %v1039 = vadd.f32 %v1037, %v1038
      %v1040 = vrot.slane %v1039, 2
      %v1041 = vadd.f32 %v1039, %v1040
      %v1042 = vrot.slane %v1041, 1
      %v1043 = vadd.f32 %v1041, %v1042
      %1044 = vst [vmem:[%s297 + $0x1] sm:$0x1] %v1043
      %v1045 = vpack.c.bf16 %v985, %v985
      %v1046 = vpack.c.bf16 %v986, %v986
      %v1047 = vpack.c.bf16 %v987, %v987
      %v1048 = vpack.c.bf16 %v988, %v988
      %v1049 = vpack.c.bf16 %v989, %v989
      %v1050 = vpack.c.bf16 %v990, %v990
      %v1051 = vpack.c.bf16 %v991, %v991
      %v1052 = vpack.c.bf16 %v992, %v992
      %v1053 = vpack.c.bf16 %v993, %v993
      %v1054 = vpack.c.bf16 %v994, %v994
      %v1055 = vpack.c.bf16 %v995, %v995
      %v1056 = vpack.c.bf16 %v996, %v996
      %1057 = vst [vmem:[%s288] sm:$0xf] %v1045
      %1058 = vst [vmem:[%s288 + $0x4] sm:$0xf] %v1046
      %1059 = vst [vmem:[%s288 + $0x8] sm:$0xf] %v1047
      %1060 = vst [vmem:[%s288 + $0xc] sm:$0xf] %v1048
      %1061 = vst [vmem:[%s288 + $0x10] sm:$0xf] %v1049
      %1062 = vst [vmem:[%s288 + $0x14] sm:$0xf] %v1050
      %1063 = vst [vmem:[%s288 + $0x18] sm:$0xf] %v1051
      %1064 = vst [vmem:[%s288 + $0x1c] sm:$0xf] %v1052
      %1065 = vst [vmem:[%s288 + $0x20] sm:$0xf] %v1053
      %1066 = vst [vmem:[%s288 + $0x24] sm:$0xf] %v1054
      %1067 = vst [vmem:[%s288 + $0x28] sm:$0xf] %v1055
      %1068 = vst [vmem:[%s288 + $0x2c] sm:$0xf] %v1056
      %s1069 = smul.u32 %s20, 3
      %s1070 = sadd.s32 %s1069, %s21
      %s1071 = smul.u32 12, %s1070
      %p1072 = scmp.lt.s32.totalorder %s1071, 71
      %s1073 = scalar_select %p1072, %s1071, 71
      %s1074 = smul.addr %s1073, 4
      %s1075 = scalar_lea.vmem %s3, %s1074
      %s1076 = smul.u32 %s20, 3
      %s1077 = sadd.s32 %s1076, %s21
      %p1078 = scmp.lt.s32.totalorder %s1077, 5
      %s1079 = scalar_select %p1078, %s1077, 5
      %s1080 = smul.addr %s1079, 8
      %s1081 = scalar_lea.vmem %s4, %s1080
      // Predicated region
      $region33: #{_lambda_.1} parent=31 // pred_check
        %p1082 = pneg %p127
      $region34: #{_lambda_.1} parent=31 // pred_check_branch
        %1084 = sbr.rel (%p1082) target = $region36
      $region35: #{_lambda_.1} parent=31 // pred_region
        %s1085 = smul.u32 %s20, 3
        %s1086 = sadd.s32 %s1085, %s21
        %s1087 = smul.u32 12, %s1086
      $region36: #{_lambda_.1} parent=31 // pred_fallthru
        _
      // Predicated region
      $region37: #{_lambda_.1} parent=31 // pred_check
        %p1088 = pneg %p157
      $region38: #{_lambda_.1} parent=31 // pred_check_branch
        %1090 = sbr.rel (%p1088) target = $region40
      $region39: #{_lambda_.1} parent=31 // pred_region
        %s1091 = smul.u32 %s20, 3
        %s1092 = sadd.s32 %s1091, %s21
      $region40: #{_lambda_.1} parent=31 // pred_fallthru
        _
    $region32: #{_lambda_.1} parent=5 // pred_fallthru
      _
    %p1093 = scmp.le.s32.totalorder 2, %s11
    // Predicated region
    $region41: #{_lambda_.1} parent=5 // pred_check
      %p1094 = pneg %p1093
    $region42: #{_lambda_.1} parent=5 // pred_check_branch
      %1096 = sbr.rel (%p1094) target = $region44
    $region43: #{_lambda_.1} parent=5 // pred_region
      %s1097 = ssub.s32 %s11, 2
      // Predicated region
      $region45: #{_lambda_.1} parent=43 // pred_check
        %p1098 = pneg %p133
      $region46: #{_lambda_.1} parent=43 // pred_check_branch
        %1100 = sbr.rel (%p1098) target = $region48
      $region47: #{_lambda_.1} parent=43 // pred_region
        %s1101 = smul.u32 %s22, 3
        %s1102 = sadd.s32 %s1101, %s23
        %s1103 = smul.u32 12, %s1102
        %p1104 = scmp.lt.s32.totalorder %s1103, 71
        %s1105 = scalar_select %p1104, %s1103, 71
        %s1106 = smul.addr %s1105, 4
        %s1107 = scalar_lea.vmem %s3, %s1106
      $region48: #{_lambda_.1} parent=43 // pred_fallthru
        _
      // Predicated region
      $region49: #{_lambda_.1} parent=43 // pred_check
        %p1108 = pneg %p163
      $region50: #{_lambda_.1} parent=43 // pred_check_branch
        %1110 = sbr.rel (%p1108) target = $region52
      $region51: #{_lambda_.1} parent=43 // pred_region
        %s1111 = smul.u32 %s22, 3
        %s1112 = sadd.s32 %s1111, %s23
        %p1113 = scmp.lt.s32.totalorder %s1112, 5
        %s1114 = scalar_select %p1113, %s1112, 5
        %s1115 = smul.addr %s1114, 8
        %s1116 = scalar_lea.vmem %s4, %s1115
      $region52: #{_lambda_.1} parent=43 // pred_fallthru
        _
    $region44: #{_lambda_.1} parent=5 // pred_fallthru
      _
  $region6: #{_lambda_.1} parent=0 // loop_footer
    %s15 = sadd.s32 1, %s11
  $region7: #{_lambda_.1} parent=0 // loop_footer_branch
    %10 = sbr.rel target = $region3
  $region8: #{_lambda_.1} parent=0 // loop_exit
    _

</llo_original>
